<compile_context>
chip_gen: v5e
topology: v5e:2x2
jax: 0.10.0
libtpu: 0.0.40
codegen_flags: <defaults>
</compile_context>

<pallas_src>
import jax
import jax.numpy as jnp
from jax.experimental import pallas as pl
from jax.experimental.pallas import tpu as pltpu

_LANE = 128          # TPU lane width (last-dim tiling unit)
_MAX_BLOCK_B = 8192  # VMEM-safe cap for the batch tile (see review, v7x budget)


def _round_up(x, m):
    return ((x + m - 1) // m) * m


# ---------------------------------------------------------------------------
# Kernel: one batch tile through all three layers, output written transposed
# (lane-dense) as (action_dim, block_b).
# ---------------------------------------------------------------------------
def _qnet2_kernel(
    x_ref,    # (block_b, state_dim)
    w1_ref,   # (state_dim, 8)
    b1_ref,   # (1, 8)
    w2_ref,   # (8, 16)
    b2_ref,   # (1, 16)
    w3_ref,   # (action_dim, 16)   -- PyTorch (out, in) layout
    b3_ref,   # (action_dim, 1)
    ot_ref,   # (action_dim, block_b)   -- transposed, lane-dense output
):
    x = x_ref[...]

    # h1 = relu(x @ W1 + b1)            -> (block_b, 8)
    h1 = jnp.dot(x, w1_ref[...], preferred_element_type=jnp.float32)
    h1 = jnp.maximum(h1 + b1_ref[...], 0.0)

    # h2 = relu(h1 @ W2 + b2)           -> (block_b, 16)
    h2 = jnp.dot(h1, w2_ref[...], preferred_element_type=jnp.float32)
    h2 = jnp.maximum(h2 + b2_ref[...], 0.0)

    # q^T = W3 @ h2^T + b3              -> (action_dim, block_b)
    # h2^T is a small (block_b, 16) -> (16, block_b) XLU transpose; the MXU/VPU
    # slots are otherwise idle so this is effectively free, and it makes the
    # output store lane-dense (no masked partial stores, 32x smaller out tile).
    qt = jnp.dot(w3_ref[...], h2.T, preferred_element_type=jnp.float32)
    ot_ref[...] = qt + b3_ref[...]


# ---------------------------------------------------------------------------
# Batch-tile picker: multiple of 128 (lane-dense out), >=2 blocks when B >= 256
# (v7x megacore), capped for VMEM; tiny B gets one full-batch block (full-dim
# blocks are exempt from the (8,128) divisibility rule, so no padding needed).
# ---------------------------------------------------------------------------
def _pick_tiling(B, requested):
    requested = min(max(requested, _LANE), _MAX_BLOCK_B)
    requested = (requested // _LANE) * _LANE
    if B < 2 * _LANE:
        return B, B, 1                      # single full-batch block
    nb = max(2, pl.cdiv(B, requested))      # >= 2 parallel steps for v7x
    block_b = _round_up(pl.cdiv(B, nb), _LANE)
    nb = pl.cdiv(B, block_b)
    return block_b, nb * block_b, nb        # (block_b, padded B, num blocks)


def q_network2_forward(x, params, *, block_b=4096):
    """Fused Pallas forward. x: (B, state_dim) float32 -> (B, action_dim).

    params (laid out once at init, zero per-call layout work):
      w1 (state_dim, 8), b1 (1, 8)
      w2 (8, 16),        b2 (1, 16)
      w3 (action_dim, 16) [PyTorch (out,in) layout], b3 (action_dim, 1)
    """
    B, state_dim = x.shape
    action_dim = params["w3"].shape[0]

    bb, B_pad, nb = _pick_tiling(B, block_b)
    if B_pad > B:
        x = jnp.pad(x, ((0, B_pad - B), (0, 0)))

    w1, b1 = params["w1"], params["b1"]
    w2, b2 = params["w2"], params["b2"]
    w3, b3 = params["w3"], params["b3"]

    # Weights/biases: constant index_map -> resident across batch-grid steps.
    const2d = lambda a: pl.BlockSpec(a.shape, lambda i: (0, 0))

    flops = 2 * B_pad * (state_dim * 8 + 8 * 16 + 16 * action_dim)
    bytes_accessed = 4 * (
        B_pad * state_dim + B_pad * action_dim
        + state_dim * 8 + 8 + 8 * 16 + 16 + action_dim * 16 + action_dim
    )

    out_t = pl.pallas_call(
        _qnet2_kernel,
        out_shape=jax.ShapeDtypeStruct((action_dim, B_pad), jnp.float32),
        grid=(nb,),
        in_specs=[
            pl.BlockSpec((bb, state_dim), lambda i: (i, 0)),   # x: tiled on batch
            const2d(w1), const2d(b1),
            const2d(w2), const2d(b2),
            const2d(w3), const2d(b3),
        ],
        out_specs=pl.BlockSpec((action_dim, bb), lambda i: (0, i)),  # lane-dense
        compiler_params=pltpu.CompilerParams(
            dimension_semantics=("parallel",),
            vmem_limit_bytes=48 * 1024 * 1024,
        ),
        cost_estimate=pl.CostEstimate(
            flops=flops, transcendentals=0, bytes_accessed=bytes_accessed
        ),
    )(x, w1, b1, w2, b2, w3, b3)

    # (action_dim, B_pad) -> (B, action_dim); tiny transpose on the narrow output.
    return out_t[:, :B].T


def q_network2_apply(x, params, *, block_b=4096, min_pallas_batch=512):
    """Dispatcher: tiny batches (e.g. RL action selection) are pure fixed
    overhead for a custom call, so they stay on plain XLA; large batches
    (training / replay) use the fused Pallas kernel."""
    if x.shape[0] < min_pallas_batch:
        return reference_forward(x, params)
    return q_network2_forward(x, params, block_b=block_b)


def init_params(key, state_dim, action_dim):
    """nn.Linear-style init; layouts fixed ONCE here so the forward wrapper
    does no per-call transpose/reshape."""
    ks = jax.random.split(key, 6)

    def lin(kw, kb, in_f, out_f, *, keep_torch_layout=False):
        bound = 1.0 / jnp.sqrt(jnp.float32(in_f))
        w = jax.random.uniform(kw, (out_f, in_f), jnp.float32, -bound, bound)
        b = jax.random.uniform(kb, (out_f,), jnp.float32, -bound, bound)
        if keep_torch_layout:               # last layer: (out, in), bias (out, 1)
            return w, b.reshape(-1, 1)
        return w.T, b.reshape(1, -1)        # hidden layers: (in, out), bias (1, out)

    w1, b1 = lin(ks[0], ks[1], state_dim, 8)
    w2, b2 = lin(ks[2], ks[3], 8, 16)
    w3, b3 = lin(ks[4], ks[5], 16, action_dim, keep_torch_layout=True)
    return dict(w1=w1, b1=b1, w2=w2, b2=b2, w3=w3, b3=b3)


def reference_forward(x, p):
    """Pure-JAX reference replicating the PyTorch forward exactly."""
    h1 = jnp.maximum(x @ p["w1"] + p["b1"], 0.0)
    h2 = jnp.maximum(h1 @ p["w2"] + p["b2"], 0.0)
    return h2 @ p["w3"].T + p["b3"].T


if __name__ == "__main__":
    key = jax.random.PRNGKey(0)
    k_x, k_x2, k_p = jax.random.split(key, 3)

    state_dim, action_dim = 32, 4
    params = init_params(k_p, state_dim, action_dim)

    # 1) Tiny batch: single full-batch block path (forced through the kernel).
    x_small = jax.random.normal(k_x, (8, state_dim), dtype=jnp.float32)
    q_small = jax.block_until_ready(q_network2_forward(x_small, params))
    assert q_small.shape == (8, action_dim)
    assert jnp.allclose(q_small, reference_forward(x_small, params),
                        atol=1e-5, rtol=1e-5), "small-batch mismatch vs reference"

    # 2) Non-divisible batch: pad-to-multiple, 2-step parallel grid,
    #    lane-dense transposed output.
    x_odd = jax.random.normal(k_x2, (300, state_dim), dtype=jnp.float32)
    q_odd = jax.block_until_ready(q_network2_forward(x_odd, params))
    assert q_odd.shape == (300, action_dim)
    assert jnp.allclose(q_odd, reference_forward(x_odd, params),
                        atol=1e-4, rtol=1e-4), "padded-batch mismatch vs reference"

    print("KERNEL_OK")
</pallas_src>

<mosaic_0001>
module attributes {stable_mosaic.version = 11 : i64} {
  func.func @_qnet2_kernel(%arg0: i32, %arg1: memref<8x32xf32, #tpu.memory_space<vmem>>, %arg2: memref<32x8xf32, #tpu.memory_space<vmem>>, %arg3: memref<1x8xf32, #tpu.memory_space<vmem>>, %arg4: memref<8x16xf32, #tpu.memory_space<vmem>>, %arg5: memref<1x16xf32, #tpu.memory_space<vmem>>, %arg6: memref<4x16xf32, #tpu.memory_space<vmem>>, %arg7: memref<4x1xf32, #tpu.memory_space<vmem>>, %arg8: memref<4x8xf32, #tpu.memory_space<vmem>>) attributes {dimension_semantics = [#tpu.dimension_semantics<parallel>], iteration_bounds = array<i64: 1>, scalar_prefetch = 0 : i64, scratch_operands = 0 : i64, tpu.core_type = #tpu.core_type<tc>, window_params = [{transform_indices = @transform_0, window_bounds = array<i64: 8, 32>}, {pipeline_mode = #tpu.pipeline_mode<synchronous>, transform_indices = @transform_1, window_bounds = array<i64: 32, 8>}, {pipeline_mode = #tpu.pipeline_mode<synchronous>, transform_indices = @transform_2, window_bounds = array<i64: 1, 8>}, {pipeline_mode = #tpu.pipeline_mode<synchronous>, transform_indices = @transform_3, window_bounds = array<i64: 8, 16>}, {pipeline_mode = #tpu.pipeline_mode<synchronous>, transform_indices = @transform_4, window_bounds = array<i64: 1, 16>}, {pipeline_mode = #tpu.pipeline_mode<synchronous>, transform_indices = @transform_5, window_bounds = array<i64: 4, 16>}, {pipeline_mode = #tpu.pipeline_mode<synchronous>, transform_indices = @transform_6, window_bounds = array<i64: 4, 1>}, {transform_indices = @transform_7, window_bounds = array<i64: 4, 8>}]} {
    %c0 = arith.constant 0 : index
    %c0_0 = arith.constant 0 : index
    %0 = vector.load %arg1[%c0, %c0_0] : memref<8x32xf32, #tpu.memory_space<vmem>>, vector<8x32xf32>
    %c0_1 = arith.constant 0 : index
    %c0_2 = arith.constant 0 : index
    %1 = vector.load %arg2[%c0_1, %c0_2] : memref<32x8xf32, #tpu.memory_space<vmem>>, vector<32x8xf32>
    %cst = arith.constant dense<0.000000e+00> : vector<8x8xf32>
    %2 = tpu.matmul %0, %1, %cst {dimension_numbers = #tpu.dot_dimension_numbers<[1], [0], [0], [1], [0, 0, 1, 1], [], []>} : vector<8x32xf32>, vector<32x8xf32>, vector<8x8xf32> -> vector<8x8xf32>
    %c0_3 = arith.constant 0 : index
    %c0_4 = arith.constant 0 : index
    %3 = vector.load %arg3[%c0_3, %c0_4] : memref<1x8xf32, #tpu.memory_space<vmem>>, vector<1x8xf32>
    %4 = vector.broadcast %3 : vector<1x8xf32> to vector<8x8xf32>
    %5 = arith.addf %2, %4 : vector<8x8xf32>
    %cst_5 = arith.constant 0.000000e+00 : f32
    %6 = vector.broadcast %cst_5 : f32 to vector<8x8xf32>
    %7 = arith.maximumf %5, %6 : vector<8x8xf32>
    %c0_6 = arith.constant 0 : index
    %c0_7 = arith.constant 0 : index
    %8 = vector.load %arg4[%c0_6, %c0_7] : memref<8x16xf32, #tpu.memory_space<vmem>>, vector<8x16xf32>
    %cst_8 = arith.constant dense<0.000000e+00> : vector<8x16xf32>
    %9 = tpu.matmul %7, %8, %cst_8 {dimension_numbers = #tpu.dot_dimension_numbers<[1], [0], [0], [1], [0, 0, 1, 1], [], []>} : vector<8x8xf32>, vector<8x16xf32>, vector<8x16xf32> -> vector<8x16xf32>
    %c0_9 = arith.constant 0 : index
    %c0_10 = arith.constant 0 : index
    %10 = vector.load %arg5[%c0_9, %c0_10] : memref<1x16xf32, #tpu.memory_space<vmem>>, vector<1x16xf32>
    %11 = vector.broadcast %10 : vector<1x16xf32> to vector<8x16xf32>
    %12 = arith.addf %9, %11 : vector<8x16xf32>
    %cst_11 = arith.constant 0.000000e+00 : f32
    %13 = vector.broadcast %cst_11 : f32 to vector<8x16xf32>
    %14 = arith.maximumf %12, %13 : vector<8x16xf32>
    %c0_12 = arith.constant 0 : index
    %c0_13 = arith.constant 0 : index
    %15 = vector.load %arg6[%c0_12, %c0_13] : memref<4x16xf32, #tpu.memory_space<vmem>>, vector<4x16xf32>
    %16 = tpu.transpose %14, [1, 0] : vector<8x16xf32> -> vector<16x8xf32>
    %cst_14 = arith.constant dense<0.000000e+00> : vector<4x8xf32>
    %17 = tpu.matmul %15, %16, %cst_14 {dimension_numbers = #tpu.dot_dimension_numbers<[1], [0], [0], [1], [0, 0, 1, 1], [], []>} : vector<4x16xf32>, vector<16x8xf32>, vector<4x8xf32> -> vector<4x8xf32>
    %c0_15 = arith.constant 0 : index
    %c0_16 = arith.constant 0 : index
    %18 = vector.load %arg7[%c0_15, %c0_16] : memref<4x1xf32, #tpu.memory_space<vmem>>, vector<4x1xf32>
    %19 = vector.broadcast %18 : vector<4x1xf32> to vector<4x8xf32>
    %20 = arith.addf %17, %19 : vector<4x8xf32>
    %c0_17 = arith.constant 0 : index
    %c0_18 = arith.constant 0 : index
    %21 = vector.load %arg8[%c0_17, %c0_18] : memref<4x8xf32, #tpu.memory_space<vmem>>, vector<4x8xf32>
    tpu.vector_store %arg8[%c0_17, %c0_18], %20 {strides = array<i32>} : memref<4x8xf32, #tpu.memory_space<vmem>>, vector<4x8xf32>,
    return
  }
  func.func @transform_0(%arg0: i32) -> (i32, i32) {
    %c0_i32 = arith.constant 0 : i32
    %c0_i32_0 = arith.constant 0 : i32
    return %arg0, %c0_i32 : i32, i32
  }
  func.func @transform_1(%arg0: i32) -> (i32, i32) {
    %c0_i32 = arith.constant 0 : i32
    %c0_i32_0 = arith.constant 0 : i32
    %c0_i32_1 = arith.constant 0 : i32
    return %c0_i32, %c0_i32_0 : i32, i32
  }
  func.func @transform_2(%arg0: i32) -> (i32, i32) {
    %c0_i32 = arith.constant 0 : i32
    %c0_i32_0 = arith.constant 0 : i32
    %c0_i32_1 = arith.constant 0 : i32
    return %c0_i32, %c0_i32_0 : i32, i32
  }
  func.func @transform_3(%arg0: i32) -> (i32, i32) {
    %c0_i32 = arith.constant 0 : i32
    %c0_i32_0 = arith.constant 0 : i32
    %c0_i32_1 = arith.constant 0 : i32
    return %c0_i32, %c0_i32_0 : i32, i32
  }
  func.func @transform_4(%arg0: i32) -> (i32, i32) {
    %c0_i32 = arith.constant 0 : i32
    %c0_i32_0 = arith.constant 0 : i32
    %c0_i32_1 = arith.constant 0 : i32
    return %c0_i32, %c0_i32_0 : i32, i32
  }
  func.func @transform_5(%arg0: i32) -> (i32, i32) {
    %c0_i32 = arith.constant 0 : i32
    %c0_i32_0 = arith.constant 0 : i32
    %c0_i32_1 = arith.constant 0 : i32
    return %c0_i32, %c0_i32_0 : i32, i32
  }
  func.func @transform_6(%arg0: i32) -> (i32, i32) {
    %c0_i32 = arith.constant 0 : i32
    %c0_i32_0 = arith.constant 0 : i32
    %c0_i32_1 = arith.constant 0 : i32
    return %c0_i32, %c0_i32_0 : i32, i32
  }
  func.func @transform_7(%arg0: i32) -> (i32, i32) {
    %c0_i32 = arith.constant 0 : i32
    %c0_i32_0 = arith.constant 0 : i32
    return %c0_i32, %arg0 : i32, i32
  }
}

</mosaic_0001>

<llo_original>
// kernel: tpu_custom_call.1
$region0: #{tpu_custom_call.1}
  #allocation0 [shape = 'u32[]', space=smem, size = 0x4, offset = 0x4, fixed_abs, tag = 'smem constant byte address 0x4 - core index']
  #allocation1 [shape = 'u32[72,128]{1,0:T(1,128)}', space=vmem, size = 0x9000, scoped, tag = 'internal scratch']
  %s0 = inlined_call_operand.vmem [shape: f32[8,32], index: 0, kind: input, shape index: {}]
  %s1 = inlined_call_operand.vmem [shape: f32[32,8], index: 1, kind: input, shape index: {}]
  %s2 = inlined_call_operand.vmem [shape: f32[1,8], index: 2, kind: input, shape index: {}]
  %s3 = inlined_call_operand.vmem [shape: f32[8,16], index: 3, kind: input, shape index: {}]
  %s4 = inlined_call_operand.vmem [shape: f32[1,16], index: 4, kind: input, shape index: {}]
  %s5 = inlined_call_operand.vmem [shape: f32[4,16], index: 5, kind: input, shape index: {}]
  %s6 = inlined_call_operand.vmem [shape: f32[4,1], index: 6, kind: input, shape index: {}]
  %s7 = inlined_call_operand.hbm [shape: f32[4,8], index: 7, kind: output, shape index: {}]
  %s8 = sld [smem:[#allocation0]]
  $region38: #{tpu_custom_call.1} parent=0
    _
  %s10 = ssub.s32 1, %s8
  %s11 = scalar_select 0, %s10, %s8
  $region1: #{tpu_custom_call.1} parent=0
    #allocation2 [shape = 'u8[2048]{0}', space=vmem, size = 0x800, scoped, tag = 'output window, operand 0, single buffered']
    #allocation3 [shape = 's32[1]{0}', space=sflag, size = 0x4, scoped, tag = 'scoped memory for tpu_custom_call.1']
    %12 = vsyncpa [#allocation3], 0
    // Predicated region
    $region2: #{tpu_custom_call.1} parent=1 // pred_check
      _
    $region3: #{tpu_custom_call.1} parent=1 // pred_check_branch
      %14 = sbr.rel (0) target = $region5
    $region4: #{tpu_custom_call.1} parent=1 // pred_region
      _
    $region5: #{tpu_custom_call.1} parent=1 // pred_fallthru
      _
    // Predicated region
    $region6: #{tpu_custom_call.1} parent=1 // pred_check
      _
    $region7: #{tpu_custom_call.1} parent=1 // pred_check_branch
      %16 = sbr.rel (0) target = $region9
    $region8: #{tpu_custom_call.1} parent=1 // pred_region
      _
    $region9: #{tpu_custom_call.1} parent=1 // pred_fallthru
      _
    // Predicated region
    $region10: #{tpu_custom_call.1} parent=1 // pred_check
      _
    $region11: #{tpu_custom_call.1} parent=1 // pred_check_branch
      %18 = sbr.rel (0) target = $region13
    $region12: #{tpu_custom_call.1} parent=1 // pred_region
      _
    $region13: #{tpu_custom_call.1} parent=1 // pred_fallthru
      _
    // Predicated region
    $region14: #{tpu_custom_call.1} parent=1 // pred_check
      _
    $region15: #{tpu_custom_call.1} parent=1 // pred_check_branch
      %20 = sbr.rel (0) target = $region17
    $region16: #{tpu_custom_call.1} parent=1 // pred_region
      _
    $region17: #{tpu_custom_call.1} parent=1 // pred_fallthru
      _
    // Predicated region
    $region18: #{tpu_custom_call.1} parent=1 // pred_check
      _
    $region19: #{tpu_custom_call.1} parent=1 // pred_check_branch
      %22 = sbr.rel (0) target = $region21
    $region20: #{tpu_custom_call.1} parent=1 // pred_region
      _
    $region21: #{tpu_custom_call.1} parent=1 // pred_fallthru
      _
    // Predicated region
    $region22: #{tpu_custom_call.1} parent=1 // pred_check
      _
    $region23: #{tpu_custom_call.1} parent=1 // pred_check_branch
      %24 = sbr.rel (0) target = $region25
    $region24: #{tpu_custom_call.1} parent=1 // pred_region
      _
    $region25: #{tpu_custom_call.1} parent=1 // pred_fallthru
      _
    // Predicated region
    $region26: #{tpu_custom_call.1} parent=1 // pred_check
      _
    $region27: #{tpu_custom_call.1} parent=1 // pred_check_branch
      %26 = sbr.rel (0) target = $region29
    $region28: #{tpu_custom_call.1} parent=1 // pred_region
      _
    $region29: #{tpu_custom_call.1} parent=1 // pred_fallthru
      _
    %v27 = vld [vmem:[%s0] sm:$0xff]
    %v28 = vld [vmem:[%s1] sm:$0xff]
    %v29 = vld [vmem:[%s1 + $0x8] sm:$0xff]
    %v30 = vld [vmem:[%s1 + $0x10] sm:$0xff]
    %v31 = vld [vmem:[%s1 + $0x18] sm:$0xff]
    %v32 = vld [vmem:[%s2] sm:$0x1]
    %v34 = vperm.slane %v32, 0
    %vm36 = vcmask 261120
    %v38 = vsel %vm36, %v27, 0
    %40 = vmatpush.msra.mxu0 0.0
    %41 = vmatpush.msra.mxu0 0.0
    %42 = vmatpush.msra.mxu0 0.0
    %43 = vmatpush.msra.mxu0 0.0
    %44 = vmatpush.msra.mxu0 0.0
    %45 = vmatpush.msra.mxu0 0.0
    %46 = vmatpush.msra.mxu0 0.0
    %47 = vmatpush.msra.mxu0 0.0
    %48 = vmatpush.msra.mxu0 0.0
    %49 = vmatpush.msra.mxu0 0.0
    %50 = vmatpush.msra.mxu0 0.0
    %51 = vmatpush.msra.mxu0 0.0
    %52 = vmatpush.msra.mxu0 %v31
    %53 = vmatpush.msra.mxu0 %v30
    %54 = vmatpush.msra.mxu0 %v29
    %55 = vmatpush.msra.mxu0 %v28
    %56 = vmatmul.f32.gmra.mxu0 %v38
    %v57 = vpop.f32.mrf.mxu0
    %v58 = vadd.f32 %v34, %v57
    %59 = vdwg.mxu0
    %v60 = vmax.f32 %v58, 0.0
    %v61 = vld [vmem:[%s3] sm:$0xff]
    %v62 = vld [vmem:[%s4] sm:$0x1]
    %v64 = vperm.slane %v62, 0
    %vm66 = vcmask 64512
    %v68 = vsel %vm66, %v60, 0
    %70 = vmatpush.msra.mxu0 0.0
    %71 = vmatpush.msra.mxu0 0.0
    %72 = vmatpush.msra.mxu0 0.0
    %73 = vmatpush.msra.mxu0 0.0
    %74 = vmatpush.msra.mxu0 0.0
    %75 = vmatpush.msra.mxu0 0.0
    %76 = vmatpush.msra.mxu0 0.0
    %77 = vmatpush.msra.mxu0 0.0
    %78 = vmatpush.msra.mxu0 0.0
    %79 = vmatpush.msra.mxu0 0.0
    %80 = vmatpush.msra.mxu0 0.0
    %81 = vmatpush.msra.mxu0 0.0
    %82 = vmatpush.msra.mxu0 0.0
    %83 = vmatpush.msra.mxu0 0.0
    %84 = vmatpush.msra.mxu0 0.0
    %85 = vmatpush.msra.mxu0 %v61
    %86 = vmatmul.f32.gmra.mxu0 %v68
    %v87 = vpop.f32.mrf.mxu0
    %v88 = vadd.f32 %v64, %v87
    %89 = vdwg.mxu0
    %v90 = vmax.f32 %v88, 0.0
    %v91 = vld [vmem:[%s5] sm:$0xf]
    %v92 = vld [vmem:[%s6] sm:$0xf]
    %94 = vset.pattern.permute.xlu0 0
    %95 = vperm.xlu0 %94, %v92
    %v96 = vpop.permute.xlu0 %95
    %vm98 = vcmask 130048
    %v100 = vsel %vm98, %v91, 0
    %v103 = vsel %vm98, %v90, 0
    %105 = vmatpush.xpose.msra.mxu0 0.0
    %106 = vmatpush.xpose.msra.mxu0 0.0
    %107 = vmatpush.xpose.msra.mxu0 0.0
    %108 = vmatpush.xpose.msra.mxu0 0.0
    %109 = vmatpush.xpose.msra.mxu0 0.0
    %110 = vmatpush.xpose.msra.mxu0 0.0
    %111 = vmatpush.xpose.msra.mxu0 0.0
    %112 = vmatpush.xpose.msra.mxu0 0.0
    %113 = vmatpush.xpose.msra.mxu0 0.0
    %114 = vmatpush.xpose.msra.mxu0 0.0
    %115 = vmatpush.xpose.msra.mxu0 0.0
    %116 = vmatpush.xpose.msra.mxu0 0.0
    %117 = vmatpush.xpose.msra.mxu0 0.0
    %118 = vmatpush.xpose.msra.mxu0 0.0
    %119 = vmatpush.xpose.msra.mxu0 0.0
    %120 = vmatpush.xpose.msra.mxu0 %v103
    %121 = vmatmul.f32.gmra.mxu0 %v100
    %v122 = vpop.f32.mrf.mxu0
    %v123 = vadd.f32 %v96, %v122
    %124 = vdwg.mxu0
    %vm125 = vcmask 60416
    %126 = vst.msk [vmem:[#allocation2] sm:$0xf] %vm125, %v123
    // Predicated region
    $region30: #{tpu_custom_call.1} parent=1 // pred_check
      _
    $region31: #{tpu_custom_call.1} parent=1 // pred_check_branch
      %128 = sbr.rel (0) target = $region33
    $region32: #{tpu_custom_call.1} parent=1 // pred_region
      %130 = vsyncadd [#allocation3], 0
      %s132 = sshll.u32 [#allocation2], 4
      %s133 = int_to_ptr.vmem [resolvable:$true] %s132
      %s134 = sshll.u32 %s7, 4
      %s135 = int_to_ptr.hbm [resolvable:$true] %s134
      %137 = dma.vmem_to_hbm [thread:$0]  %s133, 64, %s135, [#allocation3]
    $region33: #{tpu_custom_call.1} parent=1 // pred_fallthru
      _
    // Predicated region
    $region34: #{tpu_custom_call.1} parent=1 // pred_check
      _
    $region35: #{tpu_custom_call.1} parent=1 // pred_check_branch
      %139 = sbr.rel (0) target = $region37
    $region36: #{tpu_custom_call.1} parent=1 // pred_region
      %141 = dma.done [#allocation3], 64
    $region37: #{tpu_custom_call.1} parent=1 // pred_fallthru
      _
    %142 = vsyncpa [#allocation3], 1

</llo_original>
